<compile_context>
chip_gen: v6e
topology: v6e:2x2x1
jax: 0.10.0
libtpu: 0.0.40
codegen_flags: <defaults>
</compile_context>

<pallas_src>
import jax
import jax.numpy as jnp
from jax import lax
from jax.experimental import pallas as pl
from jax.experimental.pallas import tpu as pltpu


# --------------------------- in-kernel helpers ----------------------------

def _instance_norm(x, eps=1e-5):
    # x: (H*W, C) f32; per-channel normalization over spatial positions (biased var).
    mean = jnp.mean(x, axis=0, keepdims=True)
    xc = x - mean
    var = jnp.mean(xc * xc, axis=0, keepdims=True)
    return xc * lax.rsqrt(var + eps)


def _lrelu(x, slope=0.01):
    return jnp.where(x > 0, x, x * slope)


# ---------------------- kernel 1: transposed conv -------------------------

def _transp_conv_kernel(x_ref, w_ref, o_ref):
    # x_ref: (1, Hin, Win, Cin) f32; w_ref: (Cin, kh*kw*Cout) bf16
    # o_ref: (1, Hin, kh, Win, kw*Cout) f32  (row-major identical to NHWC output)
    _, Hin, Win, Cin = x_ref.shape
    kh = o_ref.shape[2]
    kwC = o_ref.shape[4]
    x = x_ref[0].reshape(Hin * Win, Cin).astype(jnp.bfloat16)
    acc = jnp.dot(x, w_ref[...], preferred_element_type=jnp.float32)  # (Hin*Win, kh*kwC)
    for r in range(kh):
        slab = acc[:, r * kwC:(r + 1) * kwC].reshape(Hin, Win, kwC)
        o_ref[0, :, r, :, :] = slab


def transp_conv_nhwc(x_nhwc, wt):
    """ConvTranspose2d with kernel_size == stride (non-overlapping upsample).

    x_nhwc: (B, Hin, Win, Cin); wt: (Cin, Cout, k, k) (PyTorch layout).
    Output interleave is expressed through the output BlockSpec layout; the
    wrapper reshape back to (B, H, W, Cout) is purely metadata (no HBM pass)."""
    B, Hin, Win, Cin = x_nhwc.shape
    _, Cout, kh, kw = wt.shape
    w_mat = jnp.transpose(wt, (0, 2, 3, 1)).reshape(Cin, kh * kw * Cout)
    w_mat = w_mat.astype(jnp.bfloat16)
    out5 = pl.pallas_call(
        _transp_conv_kernel,
        out_shape=jax.ShapeDtypeStruct((B, Hin, kh, Win, kw * Cout), jnp.float32),
        grid=(B,),
        in_specs=[pl.BlockSpec((1, Hin, Win, Cin), lambda b: (b, 0, 0, 0)),
                  pl.BlockSpec((Cin, kh * kw * Cout), lambda b: (0, 0))],
        out_specs=pl.BlockSpec((1, Hin, kh, Win, kw * Cout),
                               lambda b: (b, 0, 0, 0, 0)),
        compiler_params=pltpu.CompilerParams(dimension_semantics=("parallel",)),
    )(x_nhwc, w_mat)
    return out5.reshape(B, Hin * kh, Win * kw, Cout)       # free (metadata) reshape


# ---------------- kernel 2: fused concat + UnetResSEBlock ------------------

def _res_se_kernel(up_ref, skip_ref, w1_ref, w2_ref, w3_ref, wfc1_ref, wfc2_ref,
                   o_ref, catpad_ref, pad2_ref, patch1_ref, patch2_ref):
    # One grid step == one batch sample (instance norm + SE are per-sample).
    _, H, W, C = up_ref.shape
    C2 = 2 * C
    HW = H * W

    # Zero only the 1-pixel halo of the padded scratches (cheap; done every step
    # so there is no cross-iteration scratch state and the grid stays parallel).
    for ref in (catpad_ref, pad2_ref):
        Hp, Wp, Cc = ref.shape
        ref[0:1, :, :] = jnp.zeros((1, Wp, Cc), jnp.float32)
        ref[Hp - 1:Hp, :, :] = jnp.zeros((1, Wp, Cc), jnp.float32)
        ref[:, 0:1, :] = jnp.zeros((Hp, 1, Cc), jnp.float32)
        ref[:, Wp - 1:Wp, :] = jnp.zeros((Hp, 1, Cc), jnp.float32)

    # Implicit torch.cat((up, skip), dim=1): two interior stores into the halo buffer.
    catpad_ref[1:H + 1, 1:W + 1, 0:C] = up_ref[0]
    catpad_ref[1:H + 1, 1:W + 1, C:C2] = skip_ref[0]

    # conv1 (3x3, pad 1): im2col -> one (H*W, 9*2C) @ (9*2C, C) MXU matmul in bf16.
    for dh in range(3):
        for dw in range(3):
            t = dh * 3 + dw
            patch1_ref[:, t * C2:(t + 1) * C2] = (
                catpad_ref[dh:dh + H, dw:dw + W, :].reshape(HW, C2)
                .astype(jnp.bfloat16))
    acc1 = jnp.dot(patch1_ref[...], w1_ref[...], preferred_element_type=jnp.float32)
    out1 = _lrelu(_instance_norm(acc1))                                  # (HW, C) f32

    # conv2 (3x3, pad 1): same im2col trick on the intermediate.
    pad2_ref[1:H + 1, 1:W + 1, :] = out1.reshape(H, W, C)
    for dh in range(3):
        for dw in range(3):
            t = dh * 3 + dw
            patch2_ref[:, t * C:(t + 1) * C] = (
                pad2_ref[dh:dh + H, dw:dw + W, :].reshape(HW, C)
                .astype(jnp.bfloat16))
    acc2 = jnp.dot(patch2_ref[...], w2_ref[...], preferred_element_type=jnp.float32)
    out2 = _instance_norm(acc2)

    # Squeeze-Excite: degenerate GEMVs stay on the VPU (no MXU push/drain bubble).
    y = jnp.mean(out2, axis=0, keepdims=True)                               # (1, C)
    h = jnp.maximum(jnp.sum(wfc1_ref[...] * y, axis=1, keepdims=True), 0.0)  # (Hd, 1)
    s = jax.nn.sigmoid(jnp.sum(wfc2_ref[...] * h, axis=0, keepdims=True))    # (1, C)
    out2 = out2 * s

    # Residual branch: 1x1 conv on the (implicitly concatenated) input + instance norm.
    xc = catpad_ref[1:H + 1, 1:W + 1, :].reshape(HW, C2).astype(jnp.bfloat16)
    res = _instance_norm(jnp.dot(xc, w3_ref[...], preferred_element_type=jnp.float32))

    o_ref[0] = _lrelu(out2 + res)


def res_se_block_nhwc(up, skip, w1, w2, w3, wfc1, wfc2):
    """UnetResSEBlock (k=3, stride=1, instance norm, SE), fused per-sample.

    Takes the transp-conv output and the skip separately; the channel concat
    and the zero padding happen inside the kernel (no wrapper HBM passes)."""
    B, H, W, C = up.shape
    C2 = 2 * C
    # Rearrange PyTorch weights to kernel layouts (tiny, done once per call).
    w1_k = jnp.transpose(w1, (2, 3, 1, 0)).reshape(9 * C2, C).astype(jnp.bfloat16)
    w2_k = jnp.transpose(w2, (2, 3, 1, 0)).reshape(9 * C, C).astype(jnp.bfloat16)
    w3_k = jnp.transpose(w3[:, :, 0, 0], (1, 0)).astype(jnp.bfloat16)    # (2C, C)
    wfc1_k = wfc1.astype(jnp.float32)                                    # (Hd, C)
    wfc2_k = jnp.transpose(wfc2, (1, 0)).astype(jnp.float32)             # (Hd, C)
    Hd = wfc1_k.shape[0]

    out = pl.pallas_call(
        _res_se_kernel,
        out_shape=jax.ShapeDtypeStruct((B, H * W, C), jnp.float32),
        grid=(B,),
        in_specs=[
            pl.BlockSpec((1, H, W, C), lambda b: (b, 0, 0, 0)),   # up
            pl.BlockSpec((1, H, W, C), lambda b: (b, 0, 0, 0)),   # skip
            pl.BlockSpec((9 * C2, C), lambda b: (0, 0)),
            pl.BlockSpec((9 * C, C), lambda b: (0, 0)),
            pl.BlockSpec((C2, C), lambda b: (0, 0)),
            pl.BlockSpec((Hd, C), lambda b: (0, 0)),
            pl.BlockSpec((Hd, C), lambda b: (0, 0)),
        ],
        out_specs=pl.BlockSpec((1, H * W, C), lambda b: (b, 0, 0)),
        scratch_shapes=[
            pltpu.VMEM((H + 2, W + 2, C2), jnp.float32),   # zero-padded [up | skip]
            pltpu.VMEM((H + 2, W + 2, C), jnp.float32),    # zero-padded conv1 output
            pltpu.VMEM((H * W, 9 * C2), jnp.bfloat16),     # conv1 im2col patches
            pltpu.VMEM((H * W, 9 * C), jnp.bfloat16),      # conv2 im2col patches
        ],
        compiler_params=pltpu.CompilerParams(dimension_semantics=("parallel",)),
    )(up, skip, w1_k, w2_k, w3_k, wfc1_k, wfc2_k)
    return out.reshape(B, H, W, C)                          # free (metadata) reshape


def upblock_forward(inp_nchw, skip_nchw, params):
    """UpBlock.forward: transp_conv(inp); cat with skip on channels; Res-SE block."""
    x = jnp.transpose(inp_nchw, (0, 2, 3, 1))        # NCHW -> NHWC (boundary only)
    skip = jnp.transpose(skip_nchw, (0, 2, 3, 1))
    up = transp_conv_nhwc(x, params["wt"])
    out = res_se_block_nhwc(up, skip, params["w1"], params["w2"], params["w3"],
                            params["wfc1"], params["wfc2"])
    return jnp.transpose(out, (0, 3, 1, 2))          # back to NCHW


# -------------------------- pure-JAX reference ---------------------------

def _ref_conv(x, w, pad):
    return lax.conv_general_dilated(
        x, w, (1, 1), [(pad, pad), (pad, pad)],
        dimension_numbers=("NCHW", "OIHW", "NCHW"),
        precision=lax.Precision.HIGHEST)


def _ref_inorm(x, eps=1e-5):
    mean = x.mean(axis=(2, 3), keepdims=True)
    var = ((x - mean) ** 2).mean(axis=(2, 3), keepdims=True)
    return (x - mean) / jnp.sqrt(var + eps)


def _ref_lrelu(x):
    return jnp.where(x > 0, x, 0.01 * x)


def ref_forward(inp, skip, params):
    wt = params["wt"]
    k = wt.shape[2]
    w_conv = jnp.transpose(jnp.flip(wt, axis=(2, 3)), (1, 0, 2, 3))
    up = lax.conv_general_dilated(
        inp, w_conv, (1, 1), [(k - 1, k - 1), (k - 1, k - 1)],
        lhs_dilation=(k, k), dimension_numbers=("NCHW", "OIHW", "NCHW"),
        precision=lax.Precision.HIGHEST)
    x = jnp.concatenate([up, skip], axis=1)
    o1 = _ref_lrelu(_ref_inorm(_ref_conv(x, params["w1"], 1)))
    o2 = _ref_inorm(_ref_conv(o1, params["w2"], 1))
    y = o2.mean(axis=(2, 3))
    h = jnp.maximum(y @ params["wfc1"].T, 0.0)
    s = jax.nn.sigmoid(h @ params["wfc2"].T)
    o2 = o2 * s[:, :, None, None]
    res = _ref_inorm(_ref_conv(x, params["w3"], 0))
    return _ref_lrelu(o2 + res)


# --------------------------------- main -----------------------------------

if __name__ == "__main__":
    B, Cin, Hin, Win = 2, 32, 8, 8
    Cout, k = 16, 2           # upsample_kernel_size == stride == 2
    key = jax.random.PRNGKey(0)
    ks = jax.random.split(key, 8)
    inp = jax.random.normal(ks[0], (B, Cin, Hin, Win), jnp.float32)
    skip = jax.random.normal(ks[1], (B, Cout, Hin * k, Win * k), jnp.float32)

    # Deterministic synthetic parameters (PyTorch weight layouts, all bias=False).
    params = {
        "wt":   jax.random.normal(ks[2], (Cin, Cout, k, k), jnp.float32) * 0.1,
        "w1":   jax.random.normal(ks[3], (Cout, 2 * Cout, 3, 3), jnp.float32) * 0.1,
        "w2":   jax.random.normal(ks[4], (Cout, Cout, 3, 3), jnp.float32) * 0.1,
        "w3":   jax.random.normal(ks[5], (Cout, 2 * Cout, 1, 1), jnp.float32) * 0.1,
        "wfc1": jax.random.normal(ks[6], (Cout // 16, Cout), jnp.float32) * 0.1,
        "wfc2": jax.random.normal(ks[7], (Cout, Cout // 16), jnp.float32) * 0.1,
    }

    out = upblock_forward(inp, skip, params)
    jax.block_until_ready(out)

    ref = ref_forward(inp, skip, params)
    err = float(jnp.max(jnp.abs(out - ref)))
    if out.shape == ref.shape and err < 5e-2:
        print("KERNEL_OK")
    else:
        print("MISMATCH max_abs_err=", err, "shape=", out.shape)
</pallas_src>

<mosaic_0001>
module attributes {stable_mosaic.version = 11 : i64} {
  func.func @_transp_conv_kernel(%arg0: i32, %arg1: memref<1x8x8x32xf32, #tpu.memory_space<vmem>>, %arg2: memref<32x64xbf16, #tpu.memory_space<vmem>>, %arg3: memref<1x8x2x8x32xf32, #tpu.memory_space<vmem>>) attributes {dimension_semantics = [#tpu.dimension_semantics<parallel>], iteration_bounds = array<i64: 2>, scalar_prefetch = 0 : i64, scratch_operands = 0 : i64, tpu.core_type = #tpu.core_type<tc>, window_params = [{transform_indices = @transform_0, window_bounds = array<i64: 1, 8, 8, 32>}, {pipeline_mode = #tpu.pipeline_mode<synchronous>, transform_indices = @transform_1, window_bounds = array<i64: 32, 64>}, {transform_indices = @transform_2, window_bounds = array<i64: 1, 8, 2, 8, 32>}]} {
    %c0 = arith.constant 0 : index
    %c0_0 = arith.constant 0 : index
    %c0_1 = arith.constant 0 : index
    %c0_2 = arith.constant 0 : index
    %0 = vector.load %arg1[%c0, %c0_0, %c0_1, %c0_2] : memref<1x8x8x32xf32, #tpu.memory_space<vmem>>, vector<1x8x8x32xf32>
    %1 = vector.shape_cast %0 : vector<1x8x8x32xf32> to vector<8x8x32xf32>
    %2 = vector.shape_cast %1 : vector<8x8x32xf32> to vector<64x32xf32>
    %3 = arith.truncf %2 : vector<64x32xf32> to vector<64x32xbf16>
    %c0_3 = arith.constant 0 : index
    %c0_4 = arith.constant 0 : index
    %4 = vector.load %arg2[%c0_3, %c0_4] : memref<32x64xbf16, #tpu.memory_space<vmem>>, vector<32x64xbf16>
    %cst = arith.constant dense<0.000000e+00> : vector<64x64xf32>
    %5 = tpu.matmul %3, %4, %cst {dimension_numbers = #tpu.dot_dimension_numbers<[1], [0], [0], [1], [0, 0, 1, 1], [], []>} : vector<64x32xbf16>, vector<32x64xbf16>, vector<64x64xf32> -> vector<64x64xf32>
    %6 = vector.extract_strided_slice %5 {offsets = [0, 0], sizes = [64, 32], strides = [1, 1]} : vector<64x64xf32> to vector<64x32xf32>
    %7 = vector.shape_cast %6 : vector<64x32xf32> to vector<8x8x32xf32>
    %c0_5 = arith.constant 0 : index
    %c0_6 = arith.constant 0 : index
    %c0_7 = arith.constant 0 : index
    %c0_8 = arith.constant 0 : index
    %c0_9 = arith.constant 0 : index
    %8 = vector.load %arg3[%c0_5, %c0_6, %c0_7, %c0_8, %c0_9] : memref<1x8x2x8x32xf32, #tpu.memory_space<vmem>>, vector<1x8x1x8x32xf32>
    %9 = vector.shape_cast %8 : vector<1x8x1x8x32xf32> to vector<8x8x32xf32>
    %10 = vector.shape_cast %7 : vector<8x8x32xf32> to vector<1x8x1x8x32xf32>
    tpu.vector_store %arg3[%c0_5, %c0_6, %c0_7, %c0_8, %c0_9], %10 {strides = array<i32>} : memref<1x8x2x8x32xf32, #tpu.memory_space<vmem>>, vector<1x8x1x8x32xf32>,
    %11 = vector.extract_strided_slice %5 {offsets = [0, 32], sizes = [64, 32], strides = [1, 1]} : vector<64x64xf32> to vector<64x32xf32>
    %12 = vector.shape_cast %11 : vector<64x32xf32> to vector<8x8x32xf32>
    %c0_10 = arith.constant 0 : index
    %c0_11 = arith.constant 0 : index
    %c1 = arith.constant 1 : index
    %c0_12 = arith.constant 0 : index
    %c0_13 = arith.constant 0 : index
    %13 = vector.load %arg3[%c0_10, %c0_11, %c1, %c0_12, %c0_13] : memref<1x8x2x8x32xf32, #tpu.memory_space<vmem>>, vector<1x8x1x8x32xf32>
    %14 = vector.shape_cast %13 : vector<1x8x1x8x32xf32> to vector<8x8x32xf32>
    %15 = vector.shape_cast %12 : vector<8x8x32xf32> to vector<1x8x1x8x32xf32>
    tpu.vector_store %arg3[%c0_10, %c0_11, %c1, %c0_12, %c0_13], %15 {strides = array<i32>} : memref<1x8x2x8x32xf32, #tpu.memory_space<vmem>>, vector<1x8x1x8x32xf32>,
    return
  }
  func.func @transform_0(%arg0: i32) -> (i32, i32, i32, i32) {
    %c0_i32 = arith.constant 0 : i32
    %c0_i32_0 = arith.constant 0 : i32
    %c0_i32_1 = arith.constant 0 : i32
    %c0_i32_2 = arith.constant 0 : i32
    return %arg0, %c0_i32, %c0_i32_0, %c0_i32_1 : i32, i32, i32, i32
  }
  func.func @transform_1(%arg0: i32) -> (i32, i32) {
    %c0_i32 = arith.constant 0 : i32
    %c0_i32_0 = arith.constant 0 : i32
    %c0_i32_1 = arith.constant 0 : i32
    return %c0_i32, %c0_i32_0 : i32, i32
  }
  func.func @transform_2(%arg0: i32) -> (i32, i32, i32, i32, i32) {
    %c0_i32 = arith.constant 0 : i32
    %c0_i32_0 = arith.constant 0 : i32
    %c0_i32_1 = arith.constant 0 : i32
    %c0_i32_2 = arith.constant 0 : i32
    %c0_i32_3 = arith.constant 0 : i32
    return %arg0, %c0_i32, %c0_i32_0, %c0_i32_1, %c0_i32_2 : i32, i32, i32, i32, i32
  }
}

</mosaic_0001>

<llo_original>
// kernel: tpu_custom_call.1
$region0: #{tpu_custom_call.1}
  #allocation0 [shape = 'u32[]', space=smem, size = 0x4, offset = 0x4, fixed_abs, tag = 'smem constant byte address 0x4 - core index']
  #allocation1 [shape = 'u32[144,128]{1,0:T(1,128)}', space=vmem, size = 0x12000, scoped, tag = 'internal scratch']
  %s0 = inlined_call_operand.hbm [shape: f32[2,8,8,32], index: 0, kind: input, shape index: {}]
  %s1 = inlined_call_operand.hbm [shape: bf16[32,64], index: 1, kind: input, shape index: {}]
  %s2 = inlined_call_operand.hbm [shape: f32[2,8,2,8,32], index: 2, kind: output, shape index: {}]
  %s3 = sld [smem:[#allocation0]]
  $region49: #{tpu_custom_call.1} parent=0
    _
  %s5 = ssub.s32 1, %s3
  %s6 = scalar_select 0, %s5, %s3
  $region1: #{tpu_custom_call.1} parent=0
    #allocation2 [shape = 'u8[65536]{0}', space=vmem, size = 0x10000, scoped, tag = 'input window, operand 0']
    #allocation3 [shape = 's32[2]{0}', space=sflag, size = 0x8, scoped, tag = 'scoped memory for tpu_custom_call.1']
    #allocation4 [shape = 's32[2]{0}', space=sflag, size = 0x8, scoped, tag = 'scoped memory for tpu_custom_call.1']
    #allocation5 [shape = 'u8[8192]{0}', space=vmem, size = 0x2000, scoped, tag = 'input window, operand 1, single buffered']
    #allocation6 [shape = 's32[1]{0}', space=sflag, size = 0x4, scoped, tag = 'scoped memory for tpu_custom_call.1']
    #allocation7 [shape = 'u8[131072]{0}', space=vmem, size = 0x20000, scoped, tag = 'output window, operand 0']
    %7 = vsyncpa [#allocation3], 0
    %s8 = scalar_lea.sflag [#allocation3], 1
    %9 = vsyncpa %s8, 0
    %10 = vsyncpa [#allocation6], 0
    %11 = vsyncpa [#allocation4], 0
    %s12 = scalar_lea.sflag [#allocation4], 1
    %13 = vsyncpa %s12, 0
    loop: start=0, step=1, limit=4
    $region2: #{tpu_custom_call.1} parent=1 // loop_pre_header
      _
    $region3: #{tpu_custom_call.1} parent=1 // loop_header
      %s15 = sphi 0, %s19
      %p16 = scmp.ge.s32.totalorder %s15, 4
      %s25 = sphi 0, %s27
      %s28 = sphi 0, %s25
      %s29 = sphi 0, %s28
      %s45 = sphi 0, %s29
      %s49 = sphi 0, %s49
      %s51 = sphi 0, %s49
      %s52 = sphi 0, %s51
      %s66 = sphi 0, %s52
      %s72 = sphi 0, %s74
      %s75 = sphi 0, %s72
      %s76 = sphi 0, %s75
      %s92 = sphi 0, %s76
    $region4: #{tpu_custom_call.1} parent=1 // loop_header_branch
      %18 = sbr.rel (%p16) target = $region8
    $region5: #{tpu_custom_call.1} parent=1 // loop_body
      %s20 = ssub.s32 %s15, 1
      %s21 = ssub.s32 %s15, 2
      %s22 = sadd.s32 %s15, 1
      %s23 = ssub.s32 %s15, %s22
      %p24 = scmp.eq.s32.totalorder %s23, 0
      %s26 = sadd.s32 %s25, 1
      %s27 = scalar_select %p24, %s25, %s26
      %p30 = pneg %p24
      %p31 = scmp.eq.s32.totalorder %s15, 1
      %p32 = por %p30, %p31
      %p33 = scmp.ne.s32.totalorder %s25, %s28
      %p34 = scmp.eq.s32.totalorder %s15, 0
      %p35 = por %p33, %p34
      %p36 = scmp.ne.s32.totalorder %s25, %s28
      %p37 = scmp.eq.s32.totalorder %s20, 1
      %p38 = por %p36, %p37
      %p39 = scmp.ne.s32.totalorder %s28, %s29
      %p40 = scmp.eq.s32.totalorder %s20, 0
      %p41 = por %p39, %p40
      %p42 = scmp.ne.s32.totalorder %s28, %s29
      %p43 = scmp.eq.s32.totalorder %s21, 1
      %p44 = por %p42, %p43
      %p46 = scmp.ne.s32.totalorder %s29, %s45
      %p47 = scmp.eq.s32.totalorder %s21, 0
      %p48 = por %p46, %p47
      %s50 = sadd.s32 %s49, 1
      %p53 = scmp.eq.s32.totalorder %s15, 1
      %p54 = scmp.ne.s32.totalorder %s49, %s51
      %p55 = scmp.eq.s32.totalorder %s15, 0
      %p56 = por %p54, %p55
      %p57 = scmp.ne.s32.totalorder %s49, %s51
      %p58 = scmp.eq.s32.totalorder %s20, 1
      %p59 = por %p57, %p58
      %p60 = scmp.ne.s32.totalorder %s51, %s52
      %p61 = scmp.eq.s32.totalorder %s20, 0
      %p62 = por %p60, %p61
      %p63 = scmp.ne.s32.totalorder %s51, %s52
      %p64 = scmp.eq.s32.totalorder %s21, 1
      %p65 = por %p63, %p64
      %p67 = scmp.ne.s32.totalorder %s52, %s66
      %p68 = scmp.eq.s32.totalorder %s21, 0
      %p69 = por %p67, %p68
      %s70 = ssub.s32 %s15, %s22
      %p71 = scmp.eq.s32.totalorder %s70, 0
      %s73 = sadd.s32 %s72, 1
      %s74 = scalar_select %p71, %s72, %s73
      %p77 = pneg %p71
      %p78 = scmp.eq.s32.totalorder %s15, 1
      %p79 = por %p77, %p78
      %p80 = scmp.ne.s32.totalorder %s72, %s75
      %p81 = scmp.eq.s32.totalorder %s15, 0
      %p82 = por %p80, %p81
      %p83 = scmp.ne.s32.totalorder %s72, %s75
      %p84 = scmp.eq.s32.totalorder %s20, 1
      %p85 = por %p83, %p84
      %p86 = scmp.ne.s32.totalorder %s75, %s76
      %p87 = scmp.eq.s32.totalorder %s20, 0
      %p88 = por %p86, %p87
      %p89 = scmp.ne.s32.totalorder %s75, %s76
      %p90 = scmp.eq.s32.totalorder %s21, 1
      %p91 = por %p89, %p90
      %p93 = scmp.ne.s32.totalorder %s76, %s92
      %p94 = scmp.eq.s32.totalorder %s21, 0
      %p95 = por %p93, %p94
      %p96 = scmp.le.s32.totalorder 1, %s15
      %p97 = scmp.lt.s32.totalorder %s15, 3
      %p98 = pnand %p96, %p97
      %p99 = pneg %p98
      // Predicated region
      $region9: #{tpu_custom_call.1} parent=5 // pred_check
        _
      $region10: #{tpu_custom_call.1} parent=5 // pred_check_branch
        %101 = sbr.rel (%p98) target = $region12
      $region11: #{tpu_custom_call.1} parent=5 // pred_region
        %s102 = ssub.s32 %s15, 1
        // Predicated region
        $region13: #{tpu_custom_call.1} parent=11 // pred_check
          %p103 = pneg %p62
        $region14: #{tpu_custom_call.1} parent=11 // pred_check_branch
          %105 = sbr.rel (%p103) target = $region16
        $region15: #{tpu_custom_call.1} parent=11 // pred_region
          %s107 = ssub.s32 256, 256
          %108 = vsyncadd [#allocation6], %s107
          %s109 = sshll.u32 [#allocation5], 4
          %s110 = int_to_ptr.vmem [resolvable:$true] %s109
          %115 = dma.hbm_to_vmem [thread:$0]  %s1, 256, %s110, [#allocation6], 64, 64, 4
        $region16: #{tpu_custom_call.1} parent=11 // pred_fallthru
          _
      $region12: #{tpu_custom_call.1} parent=5 // pred_fallthru
        _
      %p116 = scmp.lt.s32.totalorder %s15, 2
      // Predicated region
      $region17: #{tpu_custom_call.1} parent=5 // pred_check
        %p117 = pneg %p116
      $region18: #{tpu_custom_call.1} parent=5 // pred_check_branch
        %119 = sbr.rel (%p117) target = $region20
      $region19: #{tpu_custom_call.1} parent=5 // pred_region
        // Predicated region
        $region21: #{tpu_custom_call.1} parent=19 // pred_check
          %p120 = pneg %p35
        $region22: #{tpu_custom_call.1} parent=19 // pred_check_branch
          %122 = sbr.rel (%p120) target = $region24
        $region23: #{tpu_custom_call.1} parent=19 // pred_region
          %s123 = sand.u32 %s25, 1
          %s124 = scalar_lea.sflag [#allocation3], %s123
          %s125 = sand.u32 %s25, 1
          %s126 = smul.addr %s125, 64
          %s127 = scalar_lea.vmem [#allocation2], %s126
          %s129 = ssub.s32 1024, 1024
          %130 = vsyncadd %s124, %s129
          %s131 = smul.addr %s15, 8
          %s132 = smul.addr %s131, 128
          %s133 = scalar_lea.hbm %s0, %s132
          %s134 = sshll.u32 %s127, 4
          %s135 = int_to_ptr.vmem [resolvable:$true] %s134
          %140 = dma.hbm_to_vmem [thread:$0]  %s133, 1024, %s135, %s124, 128, 128, 8
        $region24: #{tpu_custom_call.1} parent=19 // pred_fallthru
          _
      $region20: #{tpu_custom_call.1} parent=5 // pred_fallthru
        _
      %p141 = scmp.le.s32.totalorder 1, %s15
      %p142 = scmp.lt.s32.totalorder %s15, 3
      %p143 = pnand %p141, %p142
      %p144 = pneg %p143
      // Predicated region
      $region25: #{tpu_custom_call.1} parent=5 // pred_check
        _
      $region26: #{tpu_custom_call.1} parent=5 // pred_check_branch
        %146 = sbr.rel (%p143) target = $region28
      $region27: #{tpu_custom_call.1} parent=5 // pred_region
        %s147 = ssub.s32 %s15, 1
        %s148 = sand.u32 %s28, 1
        %s149 = scalar_lea.sflag [#allocation3], %s148
        %s150 = sand.u32 %s28, 1
        %s151 = smul.addr %s150, 64
        %s152 = scalar_lea.vmem [#allocation2], %s151
        // Predicated region
        $region29: #{tpu_custom_call.1} parent=27 // pred_check
          %p153 = pneg %p41
        $region30: #{tpu_custom_call.1} parent=27 // pred_check_branch
          %155 = sbr.rel (%p153) target = $region32
        $region31: #{tpu_custom_call.1} parent=27 // pred_region
          %156 = dma.done %s149, 1024
        $region32: #{tpu_custom_call.1} parent=27 // pred_fallthru
          _
        // Predicated region
        $region33: #{tpu_custom_call.1} parent=27 // pred_check
          %p157 = pneg %p62
        $region34: #{tpu_custom_call.1} parent=27 // pred_check_branch
          %159 = sbr.rel (%p157) target = $region36
        $region35: #{tpu_custom_call.1} parent=27 // pred_region
          %160 = dma.done [#allocation6], 256
        $region36: #{tpu_custom_call.1} parent=27 // pred_fallthru
          _
        %s161 = sand.u32 %s28, 1
        %s162 = scalar_lea.sflag [#allocation3], %s161
        %s163 = sand.u32 %s28, 1
        %s164 = smul.addr %s163, 64
        %s165 = scalar_lea.vmem [#allocation2], %s164
        %p166 = pneg %p41
        %p167 = pneg %p38
        %p168 = pneg %p62
        %p169 = pneg %p59
        %p170 = pneg %p88
        %p171 = pneg %p85
        %s172 = sand.u32 %s75, 1
        %s173 = scalar_lea.sflag [#allocation4], %s172
        %s174 = sand.u32 %s75, 1
        %s175 = smul.addr %s174, 128
        %s176 = scalar_lea.vmem [#allocation7], %s175
        %v178 = vld [vmem:[%s152] sm:$0xff]
        %v179 = vld [vmem:[%s152 + $0x8] sm:$0xff]
        %v180 = vld [vmem:[%s152 + $0x10] sm:$0xff]
        %v181 = vld [vmem:[%s152 + $0x18] sm:$0xff]
        %v182 = vld [vmem:[%s152 + $0x20] sm:$0xff]
        %v183 = vld [vmem:[%s152 + $0x28] sm:$0xff]
        %v184 = vld [vmem:[%s152 + $0x30] sm:$0xff]
        %v185 = vld [vmem:[%s152 + $0x38] sm:$0xff]
        %v186 = vpack.c.bf16 %v179, %v178
        %v187 = vpack.c.bf16 %v181, %v180
        %v188 = vpack.c.bf16 %v183, %v182
        %v189 = vpack.c.bf16 %v185, %v184
        %v190 = vld [vmem:[#allocation5] sm:$0xf]
        %v191 = vld [vmem:[#allocation5 + $0x4] sm:$0xf]
        %v192 = vld [vmem:[#allocation5 + $0x8] sm:$0xf]
        %v193 = vld [vmem:[#allocation5 + $0xc] sm:$0xf]
        %v198 = vunpack.c.l.b16 %v190
        %v199 = vunpack.c.l.b16 %v191
        %v200 = vunpack.c.l.b16 %v192
        %v201 = vunpack.c.l.b16 %v193
        %v202 = vpack.c.b16 %v199, %v198
        %v203 = vpack.c.b16 %v201, %v200
        %vm206 = vcmask 261120
        %v208 = vsel %vm206, %v186, 0
        %v211 = vsel %vm206, %v187, 0
        %v214 = vsel %vm206, %v188, 0
        %v217 = vsel %vm206, %v189, 0
        %219 = vmatprep.subr.bf16.mxu0 0
        %220 = vmatpush1.bf16.msra.mxu0 0
        %221 = vmatprep.subr.bf16.mxu0 0
        %222 = vmatpush1.bf16.msra.mxu0 0
        %223 = vmatprep.subr.bf16.mxu0 0
        %224 = vmatpush1.bf16.msra.mxu0 0
        %225 = vmatprep.subr.bf16.mxu0 0
        %226 = vmatpush1.bf16.msra.mxu0 0
        %227 = vmatprep.subr.bf16.mxu0 0
        %228 = vmatpush1.bf16.msra.mxu0 0
        %229 = vmatprep.subr.bf16.mxu0 0
        %230 = vmatpush1.bf16.msra.mxu0 0
        %231 = vmatprep.subr.bf16.mxu0 0
        %232 = vmatpush1.bf16.msra.mxu0 %v203
        %233 = vmatprep.subr.bf16.mxu0 0
        %234 = vmatpush1.bf16.msra.mxu0 %v202
        %235 = vmatprep.subr.bf16.mxu0 0
        %236 = vmatpush2.bf16.msra.mxu0 0
        %237 = vmatprep.subr.bf16.mxu0 0
        %238 = vmatpush2.bf16.msra.mxu0 0
        %239 = vmatprep.subr.bf16.mxu0 0
        %240 = vmatpush2.bf16.msra.mxu0 0
        %241 = vmatprep.subr.bf16.mxu0 0
        %242 = vmatpush2.bf16.msra.mxu0 0
        %243 = vmatprep.subr.bf16.mxu0 0
        %244 = vmatpush2.bf16.msra.mxu0 0
        %245 = vmatprep.subr.bf16.mxu0 0
        %246 = vmatpush2.bf16.msra.mxu0 0
        %247 = vmatprep.subr.bf16.mxu0 0
        %248 = vmatpush2.bf16.msra.mxu0 0
        %249 = vmatprep.subr.bf16.mxu0 0
        %250 = vmatpush2.bf16.msra.mxu0 0
        %251 = vmatprep.mubr.bf16.mxu0 0
        %252 = vmatmul.mubr.bf16.gmra.mxu0 %v208
        %v253 = vpop.f32.mrf.mxu0
        %v254 = vadd.f32 0.0, %v253
        %v255 = vpop.f32.mrf.mxu0
        %v256 = vpop.f32.mrf.mxu0
        %v257 = vadd.f32 0.0, %v256
        %v258 = vpop.f32.mrf.mxu0
        %259 = vmatprep.mubr.bf16.mxu0 0
        %260 = vmatmul.mubr.bf16.gmra.mxu0 %v211
        %v261 = vpop.f32.mrf.mxu0
        %v262 = vadd.f32 0.0, %v261
        %v263 = vpop.f32.mrf.mxu0
        %v264 = vpop.f32.mrf.mxu0
        %v265 = vadd.f32 0.0, %v264
        %v266 = vpop.f32.mrf.mxu0
        %267 = vmatprep.mubr.bf16.mxu0 0
        %268 = vmatmul.mubr.bf16.gmra.mxu0 %v214
        %v269 = vpop.f32.mrf.mxu0
        %v270 = vadd.f32 0.0, %v269
        %v271 = vpop.f32.mrf.mxu0
        %v272 = vpop.f32.mrf.mxu0
        %v273 = vadd.f32 0.0, %v272
        %v274 = vpop.f32.mrf.mxu0
        %275 = vmatprep.mubr.bf16.mxu0 0
        %276 = vmatmul.mubr.bf16.gmra.mxu0 %v217
        %v277 = vpop.f32.mrf.mxu0
        %v278 = vadd.f32 0.0, %v277
        %v279 = vpop.f32.mrf.mxu0
        %v280 = vpop.f32.mrf.mxu0
        %v281 = vadd.f32 0.0, %v280
        %v282 = vpop.f32.mrf.mxu0
        %283 = vdwg.mxu0
        %284 = vst.msk [vmem:[%s176] sm:$0xff] %vm206, %v254
        %285 = vst.msk [vmem:[%s176 + $0x10] sm:$0xff] %vm206, %v257
        %286 = vst.msk [vmem:[%s176 + $0x20] sm:$0xff] %vm206, %v262
        %287 = vst.msk [vmem:[%s176 + $0x30] sm:$0xff] %vm206, %v265
        %288 = vst.msk [vmem:[%s176 + $0x40] sm:$0xff] %vm206, %v270
        %289 = vst.msk [vmem:[%s176 + $0x50] sm:$0xff] %vm206, %v273
        %290 = vst.msk [vmem:[%s176 + $0x60] sm:$0xff] %vm206, %v278
        %291 = vst.msk [vmem:[%s176 + $0x70] sm:$0xff] %vm206, %v281
        %300 = vrot.lane.b32.xlu0 %v254, 96
        %v301 = vpop.permute.xlu0 %300
        %302 = vrot.lane.b32.xlu0 %v257, 96
        %v303 = vpop.permute.xlu0 %302
        %304 = vrot.lane.b32.xlu0 %v262, 96
        %v305 = vpop.permute.xlu0 %304
        %306 = vrot.lane.b32.xlu0 %v265, 96
        %v307 = vpop.permute.xlu0 %306
        %308 = vrot.lane.b32.xlu0 %v270, 96
        %v309 = vpop.permute.xlu0 %308
        %310 = vrot.lane.b32.xlu0 %v273, 96
        %v311 = vpop.permute.xlu0 %310
        %312 = vrot.lane.b32.xlu0 %v278, 96
        %v313 = vpop.permute.xlu0 %312
        %314 = vrot.lane.b32.xlu0 %v281, 96
        %v315 = vpop.permute.xlu0 %314
        %s324 = scalar_lea.vmem %s176, 8 [#allocation7]
        %325 = vst.msk [vmem:[%s324] sm:$0xff] %vm206, %v301
        %326 = vst.msk [vmem:[%s324 + $0x10] sm:$0xff] %vm206, %v303
        %327 = vst.msk [vmem:[%s324 + $0x20] sm:$0xff] %vm206, %v305
        %328 = vst.msk [vmem:[%s324 + $0x30] sm:$0xff] %vm206, %v307
        %329 = vst.msk [vmem:[%s324 + $0x40] sm:$0xff] %vm206, %v309
        %330 = vst.msk [vmem:[%s324 + $0x50] sm:$0xff] %vm206, %v311
        %331 = vst.msk [vmem:[%s324 + $0x60] sm:$0xff] %vm206, %v313
        %332 = vst.msk [vmem:[%s324 + $0x70] sm:$0xff] %vm206, %v315
        %s333 = sand.u32 %s75, 1
        %s334 = scalar_lea.sflag [#allocation4], %s333
        %s335 = sand.u32 %s75, 1
        %s336 = smul.addr %s335, 128
        %s337 = scalar_lea.vmem [#allocation7], %s336
        // Predicated region
        $region37: #{tpu_custom_call.1} parent=27 // pred_check
          %p338 = pneg %p85
        $region38: #{tpu_custom_call.1} parent=27 // pred_check_branch
          %340 = sbr.rel (%p338) target = $region40
        $region39: #{tpu_custom_call.1} parent=27 // pred_region
          %s342 = ssub.s32 2048, 2048
          %343 = vsyncadd %s334, %s342
          %s344 = smul.addr %s20, 16
          %s345 = smul.addr %s344, 128
          %s346 = scalar_lea.hbm %s2, %s345
          %s347 = sshll.u32 %s337, 4
          %s348 = int_to_ptr.vmem [resolvable:$true] %s347
          %353 = dma.vmem_to_hbm [thread:$0]  %s348, 2048, %s346, %s334, 128, 128, 8
        $region40: #{tpu_custom_call.1} parent=27 // pred_fallthru
          _
      $region28: #{tpu_custom_call.1} parent=5 // pred_fallthru
        _
      %p354 = scmp.le.s32.totalorder 2, %s15
      // Predicated region
      $region41: #{tpu_custom_call.1} parent=5 // pred_check
        %p355 = pneg %p354
      $region42: #{tpu_custom_call.1} parent=5 // pred_check_branch
        %357 = sbr.rel (%p355) target = $region44
      $region43: #{tpu_custom_call.1} parent=5 // pred_region
        %s358 = ssub.s32 %s15, 2
        // Predicated region
        $region45: #{tpu_custom_call.1} parent=43 // pred_check
          %p359 = pneg %p91
        $region46: #{tpu_custom_call.1} parent=43 // pred_check_branch
          %361 = sbr.rel (%p359) target = $region48
        $region47: #{tpu_custom_call.1} parent=43 // pred_region
          %s362 = sand.u32 %s76, 1
          %s363 = scalar_lea.sflag [#allocation4], %s362
          %s364 = sand.u32 %s76, 1
          %s365 = smul.addr %s364, 128
          %s366 = scalar_lea.vmem [#allocation7], %s365
          %367 = dma.done %s363, 2048
        $region48: #{tpu_custom_call.1} parent=43 // pred_fallthru
          _
      $region44: #{tpu_custom_call.1} parent=5 // pred_fallthru
        _
    $region6: #{tpu_custom_call.1} parent=1 // loop_footer
      %s19 = sadd.s32 1, %s15
    $region7: #{tpu_custom_call.1} parent=1 // loop_footer_branch
      %14 = sbr.rel target = $region3
    $region8: #{tpu_custom_call.1} parent=1 // loop_exit
      _
    %368 = vsyncpa [#allocation3], 1
    %s369 = scalar_lea.sflag [#allocation3], 1
    %370 = vsyncpa %s369, 1
    %371 = vsyncpa [#allocation6], 1
    %372 = vsyncpa [#allocation4], 1
    %s373 = scalar_lea.sflag [#allocation4], 1
    %374 = vsyncpa %s373, 1

</llo_original>
